<compile_context>
chip_gen: v7x
topology: tpu7x:2x2x1
jax: 0.10.0
libtpu: 0.0.40
codegen_flags: <defaults>
</compile_context>

<pallas_src>
import math

import jax
import jax.numpy as jnp
from jax.experimental import pallas as pl
from jax.experimental.pallas import tpu as pltpu


def _round_up(n, m):
    return ((n + m - 1) // m) * m


def mcnn_kernel(patches_ref, convw_ref, convb_ref, thr_ref,
                fc1w_ref, fc1b_ref, fc2w_ref, fc2b_ref, out_ref):
    tile_b, t_pad, ws_max = patches_ref.shape
    nwf = convw_ref.shape[-1]

    # One fused MXU dot for every window branch:
    #   (TILE_B*T_pad, ws_max) @ (ws_max, n_w*F)
    p2 = patches_ref[...].reshape(tile_b * t_pad, ws_max)
    s = jnp.dot(p2, convw_ref[...], preferred_element_type=jnp.float32)
    s = s.reshape(tile_b, t_pad, nwf)          # free: t_pad % 8 == 0

    # Single hoisted validity mask: time position t is valid for output column c
    # (window j = c // F) iff t < L - ws_j + 1; thr_ref holds that threshold
    # per column, built once in the wrapper.
    t_iota = jax.lax.broadcasted_iota(jnp.int32, (tile_b, t_pad, nwf), 1)
    s = jnp.where(t_iota < thr_ref[...][None], s, -jnp.inf)

    # MaxPool2d over the full conv width for every branch at once, then the
    # folded conv biases.  `feat` is already in torch.cat(_x, dim=1) layout.
    feat = jnp.max(s, axis=1) + convb_ref[...]            # (TILE_B, n_w*F)

    # TODO(synk): nn.Dropout(p=0.7) is identity here (inference); training-mode
    # stochastic masking/scaling is not implemented.
    h = jnp.dot(feat, fc1w_ref[...], preferred_element_type=jnp.float32) + fc1b_ref[...]
    logits = jnp.dot(h, fc2w_ref[...], preferred_element_type=jnp.float32) + fc2b_ref[...]

    # Stable softmax over classes; padded class lanes carry a -1e30 bias -> exp==0,
    # so they don't perturb the max/sum and store 0.
    mx = jnp.max(logits, axis=-1, keepdims=True)
    e = jnp.exp(logits - mx)
    inv = pl.reciprocal(jnp.sum(e, axis=-1, keepdims=True), approx=True)
    out_ref[...] = e * inv


def mcnn_forward(x, params, window_sizes, tile_b=8):
    """x: (B, 1, 1, L) float32 (NCHW). Returns (B, num_class) softmax probs.

    tile_b: batch rows per grid step.  Per batch row the lane-padded patch block
    costs ~T_pad*128*4 B (~32 KiB at T_pad=64, double buffered), so keep
    tile_b <~ 256 within v7x's 32 MiB default scoped VMEM; larger is fine on
    v5e/v6e's 128 MiB VMEM.
    """
    conv_w, conv_b, fc1_w, fc1_b, fc2_w, fc2_b = params
    B = x.shape[0]
    L = x.shape[-1]
    n_w = len(window_sizes)
    ws_max = max(window_sizes)
    ws_min = min(window_sizes)
    F = conv_w.shape[-1]
    H = fc1_w.shape[-1]
    C = fc2_w.shape[-1]
    nwf = n_w * F

    T_pad = _round_up(L - ws_min + 1, 8)       # sublane-aligned conv/pool width
    C_pad = _round_up(C, 128)                  # lane-dense output block
    B_pad = _round_up(B, tile_b)

    # ---- fold per-window params into fused operands (tiny, wrapper-side) ----
    w_all = jnp.transpose(conv_w, (1, 0, 2)).reshape(ws_max, nwf)   # (ws_max, n_w*F)
    b_all = conv_b.reshape(1, nwf)                                  # (1, n_w*F)
    thr = jnp.repeat(
        jnp.asarray([L - ws + 1 for ws in window_sizes], jnp.int32), F
    ).reshape(1, nwf)
    fc2_w_p = jnp.pad(fc2_w, ((0, 0), (0, C_pad - C)))
    fc2_b_p = jnp.pad(fc2_b, ((0, 0), (0, C_pad - C)), constant_values=-1e30)

    # ---- shared im2col (zero-padded taps make one patch set valid for all branches)
    # TODO(synk): im2col stays in the wrapper (plain XLA gather) for lowering
    # robustness; in-kernel construction via pltpu.roll would further cut HBM
    # traffic at large B*L.  bf16 casting is also left off to keep f32 accuracy.
    xs = x.reshape(B, L)
    xs = jnp.pad(xs, ((0, B_pad - B), (0, T_pad + ws_max - L)))
    idx = jnp.arange(T_pad)[:, None] + jnp.arange(ws_max)[None, :]
    patches = xs[:, idx]                                            # (B_pad, T_pad, ws_max)

    out = pl.pallas_call(
        mcnn_kernel,
        out_shape=jax.ShapeDtypeStruct((B_pad, C_pad), jnp.float32),
        grid_spec=pltpu.PrefetchScalarGridSpec(
            num_scalar_prefetch=0,
            grid=(B_pad // tile_b,),
            in_specs=[
                pl.BlockSpec((tile_b, T_pad, ws_max), lambda i: (i, 0, 0)),
                pl.BlockSpec((ws_max, nwf), lambda i: (0, 0)),   # weights stay resident
                pl.BlockSpec((1, nwf), lambda i: (0, 0)),
                pl.BlockSpec((1, nwf), lambda i: (0, 0)),
                pl.BlockSpec((nwf, H), lambda i: (0, 0)),
                pl.BlockSpec((1, H), lambda i: (0, 0)),
                pl.BlockSpec((H, C_pad), lambda i: (0, 0)),
                pl.BlockSpec((1, C_pad), lambda i: (0, 0)),
            ],
            out_specs=pl.BlockSpec((tile_b, C_pad), lambda i: (i, 0)),
        ),
        compiler_params=pltpu.CompilerParams(
            dimension_semantics=("parallel",)),
    )(patches, w_all, b_all, thr, fc1_w, fc1_b, fc2_w_p, fc2_b_p)
    return out[:B, :C]


def init_params(key, window_sizes, num_filters, num_hidden, num_class):
    """Deterministic synthetic init (PyTorch-style uniform bounds)."""
    ws_max = max(window_sizes)
    n_w = len(window_sizes)
    keys = jax.random.split(key, 2 * n_w + 4)

    conv_w, conv_b = [], []
    for i, ws in enumerate(window_sizes):
        bound = 1.0 / math.sqrt(ws)                  # fan_in = 1*1*ws
        w = jax.random.uniform(keys[2 * i], (ws, num_filters), jnp.float32,
                               -bound, bound)
        w = jnp.pad(w, ((0, ws_max - ws), (0, 0)))   # zero-pad taps to ws_max
        b = jax.random.uniform(keys[2 * i + 1], (num_filters,), jnp.float32,
                               -bound, bound)
        conv_w.append(w)
        conv_b.append(b)
    conv_w = jnp.stack(conv_w)                       # (n_w, ws_max, F)
    conv_b = jnp.stack(conv_b)                       # (n_w, F)

    in1 = num_filters * n_w
    b1 = 1.0 / math.sqrt(in1)
    fc1_w = jax.random.uniform(keys[-4], (in1, num_hidden), jnp.float32, -b1, b1)
    fc1_b = jax.random.uniform(keys[-3], (1, num_hidden), jnp.float32, -b1, b1)
    b2 = 1.0 / math.sqrt(num_hidden)
    fc2_w = jax.random.uniform(keys[-2], (num_hidden, num_class), jnp.float32, -b2, b2)
    fc2_b = jax.random.uniform(keys[-1], (1, num_class), jnp.float32, -b2, b2)
    return conv_w, conv_b, fc1_w, fc1_b, fc2_w, fc2_b


def mcnn_reference(x, params, window_sizes):
    """Pure-JAX semantic reference of the PyTorch forward (eval mode)."""
    conv_w, conv_b, fc1_w, fc1_b, fc2_w, fc2_b = params
    B, _, _, L = x.shape
    xs = x.reshape(B, L)
    feats = []
    for i, ws in enumerate(window_sizes):
        w = conv_w[i, :ws, :]                        # (ws, F)
        T = L - ws + 1
        cols = jnp.stack([xs[:, t:t + ws] for t in range(T)], axis=1)  # (B,T,ws)
        s = jnp.einsum('btk,kf->btf', cols, w)       # conv (valid padding)
        pooled = jnp.max(s, axis=1) + conv_b[i]      # maxpool over full width
        feats.append(pooled)
    feat = jnp.concatenate(feats, axis=-1)
    h = feat @ fc1_w + fc1_b
    logits = h @ fc2_w + fc2_b
    return jax.nn.softmax(logits, axis=-1)


if __name__ == "__main__":
    # small shapes consistent with the module's forward: input (B, 1, 1, L)
    window_sizes = [4, 8]
    L = 64            # max_length
    F = 128           # num_filters
    H = 128           # num_hidden
    C = 2             # num_class
    B = 2

    key = jax.random.PRNGKey(0)
    kp, kx = jax.random.split(key)
    params = init_params(kp, window_sizes, F, H, C)
    x = jax.random.normal(kx, (B, 1, 1, L), jnp.float32)

    out = mcnn_forward(x, params, window_sizes)
    out = jax.block_until_ready(out)

    ref = mcnn_reference(x, params, window_sizes)
    assert out.shape == (B, C)
    # tolerances slightly loosened for the EUP approx-reciprocal softmax divide
    assert jnp.allclose(jnp.sum(out, axis=-1), 1.0, atol=2e-3)
    assert jnp.allclose(out, ref, atol=2e-3, rtol=2e-3)
    print("KERNEL_OK")
</pallas_src>

<mosaic_0001>
module attributes {stable_mosaic.version = 11 : i64} {
  func.func @mcnn_kernel(%arg0: i32, %arg1: memref<8x64x8xf32, #tpu.memory_space<vmem>>, %arg2: memref<8x256xf32, #tpu.memory_space<vmem>>, %arg3: memref<1x256xf32, #tpu.memory_space<vmem>>, %arg4: memref<1x256xi32, #tpu.memory_space<vmem>>, %arg5: memref<256x128xf32, #tpu.memory_space<vmem>>, %arg6: memref<1x128xf32, #tpu.memory_space<vmem>>, %arg7: memref<128x128xf32, #tpu.memory_space<vmem>>, %arg8: memref<1x128xf32, #tpu.memory_space<vmem>>, %arg9: memref<8x128xf32, #tpu.memory_space<vmem>>) attributes {dimension_semantics = [#tpu.dimension_semantics<parallel>], iteration_bounds = array<i64: 1>, scalar_prefetch = 0 : i64, scratch_operands = 0 : i64, tpu.core_type = #tpu.core_type<tc>, window_params = [{transform_indices = @transform_0, window_bounds = array<i64: 8, 64, 8>}, {pipeline_mode = #tpu.pipeline_mode<synchronous>, transform_indices = @transform_1, window_bounds = array<i64: 8, 256>}, {pipeline_mode = #tpu.pipeline_mode<synchronous>, transform_indices = @transform_2, window_bounds = array<i64: 1, 256>}, {pipeline_mode = #tpu.pipeline_mode<synchronous>, transform_indices = @transform_3, window_bounds = array<i64: 1, 256>}, {pipeline_mode = #tpu.pipeline_mode<synchronous>, transform_indices = @transform_4, window_bounds = array<i64: 256, 128>}, {pipeline_mode = #tpu.pipeline_mode<synchronous>, transform_indices = @transform_5, window_bounds = array<i64: 1, 128>}, {pipeline_mode = #tpu.pipeline_mode<synchronous>, transform_indices = @transform_6, window_bounds = array<i64: 128, 128>}, {pipeline_mode = #tpu.pipeline_mode<synchronous>, transform_indices = @transform_7, window_bounds = array<i64: 1, 128>}, {transform_indices = @transform_8, window_bounds = array<i64: 8, 128>}]} {
    %c0 = arith.constant 0 : index
    %c0_0 = arith.constant 0 : index
    %c0_1 = arith.constant 0 : index
    %0 = vector.load %arg1[%c0, %c0_0, %c0_1] : memref<8x64x8xf32, #tpu.memory_space<vmem>>, vector<8x64x8xf32>
    %1 = vector.shape_cast %0 : vector<8x64x8xf32> to vector<512x8xf32>
    %c0_2 = arith.constant 0 : index
    %c0_3 = arith.constant 0 : index
    %2 = vector.load %arg2[%c0_2, %c0_3] : memref<8x256xf32, #tpu.memory_space<vmem>>, vector<8x256xf32>
    %cst = arith.constant dense<0.000000e+00> : vector<512x256xf32>
    %3 = tpu.matmul %1, %2, %cst {dimension_numbers = #tpu.dot_dimension_numbers<[1], [0], [0], [1], [0, 0, 1, 1], [], []>} : vector<512x8xf32>, vector<8x256xf32>, vector<512x256xf32> -> vector<512x256xf32>
    %4 = vector.shape_cast %3 : vector<512x256xf32> to vector<8x64x256xf32>
    %5 = tpu.iota {dimensions = array<i32: 1>} : vector<8x64x256xi32>
    %c0_4 = arith.constant 0 : index
    %c0_5 = arith.constant 0 : index
    %6 = vector.load %arg4[%c0_4, %c0_5] : memref<1x256xi32, #tpu.memory_space<vmem>>, vector<1x256xi32>
    %7 = vector.shape_cast %6 : vector<1x256xi32> to vector<1x1x256xi32>
    %8 = vector.broadcast %7 : vector<1x1x256xi32> to vector<8x64x256xi32>
    %9 = arith.cmpi slt, %5, %8 : vector<8x64x256xi32>
    %cst_6 = arith.constant 0xFF800000 : f32
    %10 = vector.broadcast %cst_6 : f32 to vector<8x64x256xf32>
    %11 = arith.select %9, %4, %10 : vector<8x64x256xi1>, vector<8x64x256xf32>
    %cst_7 = arith.constant dense<0xFF800000> : vector<8x256xf32>
    %12 = vector.multi_reduction <maximumf>, %11, %cst_7 [1] : vector<8x64x256xf32> to vector<8x256xf32>
    %c0_8 = arith.constant 0 : index
    %c0_9 = arith.constant 0 : index
    %13 = vector.load %arg3[%c0_8, %c0_9] : memref<1x256xf32, #tpu.memory_space<vmem>>, vector<1x256xf32>
    %14 = vector.broadcast %13 : vector<1x256xf32> to vector<8x256xf32>
    %15 = arith.addf %12, %14 : vector<8x256xf32>
    %c0_10 = arith.constant 0 : index
    %c0_11 = arith.constant 0 : index
    %16 = vector.load %arg5[%c0_10, %c0_11] : memref<256x128xf32, #tpu.memory_space<vmem>>, vector<256x128xf32>
    %cst_12 = arith.constant dense<0.000000e+00> : vector<8x128xf32>
    %17 = tpu.matmul %15, %16, %cst_12 {dimension_numbers = #tpu.dot_dimension_numbers<[1], [0], [0], [1], [0, 0, 1, 1], [], []>} : vector<8x256xf32>, vector<256x128xf32>, vector<8x128xf32> -> vector<8x128xf32>
    %c0_13 = arith.constant 0 : index
    %c0_14 = arith.constant 0 : index
    %18 = vector.load %arg6[%c0_13, %c0_14] : memref<1x128xf32, #tpu.memory_space<vmem>>, vector<1x128xf32>
    %19 = vector.broadcast %18 : vector<1x128xf32> to vector<8x128xf32>
    %20 = arith.addf %17, %19 : vector<8x128xf32>
    %c0_15 = arith.constant 0 : index
    %c0_16 = arith.constant 0 : index
    %21 = vector.load %arg7[%c0_15, %c0_16] : memref<128x128xf32, #tpu.memory_space<vmem>>, vector<128x128xf32>
    %cst_17 = arith.constant dense<0.000000e+00> : vector<8x128xf32>
    %22 = tpu.matmul %20, %21, %cst_17 {dimension_numbers = #tpu.dot_dimension_numbers<[1], [0], [0], [1], [0, 0, 1, 1], [], []>} : vector<8x128xf32>, vector<128x128xf32>, vector<8x128xf32> -> vector<8x128xf32>
    %c0_18 = arith.constant 0 : index
    %c0_19 = arith.constant 0 : index
    %23 = vector.load %arg8[%c0_18, %c0_19] : memref<1x128xf32, #tpu.memory_space<vmem>>, vector<1x128xf32>
    %24 = vector.broadcast %23 : vector<1x128xf32> to vector<8x128xf32>
    %25 = arith.addf %22, %24 : vector<8x128xf32>
    %cst_20 = arith.constant dense<0xFF800000> : vector<8xf32>
    %26 = vector.multi_reduction <maximumf>, %25, %cst_20 [1] : vector<8x128xf32> to vector<8xf32>
    %27 = vector.shape_cast %26 : vector<8xf32> to vector<8x1xf32>
    %28 = vector.broadcast %27 : vector<8x1xf32> to vector<8x128xf32>
    %29 = arith.subf %25, %28 : vector<8x128xf32>
    %30 = math.exp %29 : vector<8x128xf32>
    %cst_21 = arith.constant dense<0.000000e+00> : vector<8xf32>
    %31 = vector.multi_reduction <add>, %30, %cst_21 [1] : vector<8x128xf32> to vector<8xf32>
    %32 = vector.shape_cast %31 : vector<8xf32> to vector<8x1xf32>
    %33 = tpu.reciprocal %32 {approx = true} : vector<8x1xf32> -> vector<8x1xf32>
    %34 = vector.broadcast %33 : vector<8x1xf32> to vector<8x128xf32>
    %35 = arith.mulf %30, %34 : vector<8x128xf32>
    %c0_22 = arith.constant 0 : index
    %c0_23 = arith.constant 0 : index
    %36 = vector.load %arg9[%c0_22, %c0_23] : memref<8x128xf32, #tpu.memory_space<vmem>>, vector<8x128xf32>
    tpu.vector_store %arg9[%c0_22, %c0_23], %35 {strides = array<i32>} : memref<8x128xf32, #tpu.memory_space<vmem>>, vector<8x128xf32>,
    return
  }
  func.func @transform_0(%arg0: i32) -> (i32, i32, i32) {
    %c0_i32 = arith.constant 0 : i32
    %c0_i32_0 = arith.constant 0 : i32
    %c0_i32_1 = arith.constant 0 : i32
    return %arg0, %c0_i32, %c0_i32_0 : i32, i32, i32
  }
  func.func @transform_1(%arg0: i32) -> (i32, i32) {
    %c0_i32 = arith.constant 0 : i32
    %c0_i32_0 = arith.constant 0 : i32
    %c0_i32_1 = arith.constant 0 : i32
    return %c0_i32, %c0_i32_0 : i32, i32
  }
  func.func @transform_2(%arg0: i32) -> (i32, i32) {
    %c0_i32 = arith.constant 0 : i32
    %c0_i32_0 = arith.constant 0 : i32
    %c0_i32_1 = arith.constant 0 : i32
    return %c0_i32, %c0_i32_0 : i32, i32
  }
  func.func @transform_3(%arg0: i32) -> (i32, i32) {
    %c0_i32 = arith.constant 0 : i32
    %c0_i32_0 = arith.constant 0 : i32
    %c0_i32_1 = arith.constant 0 : i32
    return %c0_i32, %c0_i32_0 : i32, i32
  }
  func.func @transform_4(%arg0: i32) -> (i32, i32) {
    %c0_i32 = arith.constant 0 : i32
    %c0_i32_0 = arith.constant 0 : i32
    %c0_i32_1 = arith.constant 0 : i32
    return %c0_i32, %c0_i32_0 : i32, i32
  }
  func.func @transform_5(%arg0: i32) -> (i32, i32) {
    %c0_i32 = arith.constant 0 : i32
    %c0_i32_0 = arith.constant 0 : i32
    %c0_i32_1 = arith.constant 0 : i32
    return %c0_i32, %c0_i32_0 : i32, i32
  }
  func.func @transform_6(%arg0: i32) -> (i32, i32) {
    %c0_i32 = arith.constant 0 : i32
    %c0_i32_0 = arith.constant 0 : i32
    %c0_i32_1 = arith.constant 0 : i32
    return %c0_i32, %c0_i32_0 : i32, i32
  }
  func.func @transform_7(%arg0: i32) -> (i32, i32) {
    %c0_i32 = arith.constant 0 : i32
    %c0_i32_0 = arith.constant 0 : i32
    %c0_i32_1 = arith.constant 0 : i32
    return %c0_i32, %c0_i32_0 : i32, i32
  }
  func.func @transform_8(%arg0: i32) -> (i32, i32) {
    %c0_i32 = arith.constant 0 : i32
    %c0_i32_0 = arith.constant 0 : i32
    return %arg0, %c0_i32 : i32, i32
  }
}

</mosaic_0001>

<llo_original>
// kernel: tpu_custom_call.1
$region0: #{tpu_custom_call.1}
  #allocation0 [shape = 'u32[]', space=smem, size = 0x4, offset = 0x4, fixed_abs, tag = 'smem constant byte address 0x4 - core index']
  #allocation1 [shape = 'u32[144,128]{1,0:T(1,128)}', space=vmem, size = 0x12000, scoped, tag = 'internal scratch']
  %s0 = inlined_call_operand.vmem [shape: f32[8,64,8], index: 0, kind: input, shape index: {}]
  %s1 = inlined_call_operand.vmem [shape: f32[8,256], index: 1, kind: input, shape index: {}]
  %s2 = inlined_call_operand.vmem [shape: f32[1,256], index: 2, kind: input, shape index: {}]
  %s3 = inlined_call_operand.vmem [shape: s32[1,256], index: 3, kind: input, shape index: {}]
  %s4 = inlined_call_operand.vmem [shape: f32[256,128], index: 4, kind: input, shape index: {}]
  %s5 = inlined_call_operand.vmem [shape: f32[1,128], index: 5, kind: input, shape index: {}]
  %s6 = inlined_call_operand.vmem [shape: f32[128,128], index: 6, kind: input, shape index: {}]
  %s7 = inlined_call_operand.vmem [shape: f32[1,128], index: 7, kind: input, shape index: {}]
  %s8 = inlined_call_operand.hbm [shape: f32[8,128], index: 8, kind: output, shape index: {}]
  %s9 = sld [smem:[#allocation0]]
  $region42: #{tpu_custom_call.1} parent=0
    _
  %s11 = ssub.s32 1, %s9
  %s12 = scalar_select 0, %s11, %s9
  $region1: #{tpu_custom_call.1} parent=0
    #allocation2 [shape = 'u8[4096]{0}', space=vmem, size = 0x1000, scoped, tag = 'output window, operand 0, single buffered']
    #allocation3 [shape = 's32[1]{0}', space=sflag, size = 0x4, scoped, tag = 'scoped memory for tpu_custom_call.1']
    %13 = vsyncpa [#allocation3], 0
    // Predicated region
    $region2: #{tpu_custom_call.1} parent=1 // pred_check
      _
    $region3: #{tpu_custom_call.1} parent=1 // pred_check_branch
      %15 = sbr.rel (0) target = $region5
    $region4: #{tpu_custom_call.1} parent=1 // pred_region
      _
    $region5: #{tpu_custom_call.1} parent=1 // pred_fallthru
      _
    // Predicated region
    $region6: #{tpu_custom_call.1} parent=1 // pred_check
      _
    $region7: #{tpu_custom_call.1} parent=1 // pred_check_branch
      %17 = sbr.rel (0) target = $region9
    $region8: #{tpu_custom_call.1} parent=1 // pred_region
      _
    $region9: #{tpu_custom_call.1} parent=1 // pred_fallthru
      _
    // Predicated region
    $region10: #{tpu_custom_call.1} parent=1 // pred_check
      _
    $region11: #{tpu_custom_call.1} parent=1 // pred_check_branch
      %19 = sbr.rel (0) target = $region13
    $region12: #{tpu_custom_call.1} parent=1 // pred_region
      _
    $region13: #{tpu_custom_call.1} parent=1 // pred_fallthru
      _
    // Predicated region
    $region14: #{tpu_custom_call.1} parent=1 // pred_check
      _
    $region15: #{tpu_custom_call.1} parent=1 // pred_check_branch
      %21 = sbr.rel (0) target = $region17
    $region16: #{tpu_custom_call.1} parent=1 // pred_region
      _
    $region17: #{tpu_custom_call.1} parent=1 // pred_fallthru
      _
    // Predicated region
    $region18: #{tpu_custom_call.1} parent=1 // pred_check
      _
    $region19: #{tpu_custom_call.1} parent=1 // pred_check_branch
      %23 = sbr.rel (0) target = $region21
    $region20: #{tpu_custom_call.1} parent=1 // pred_region
      _
    $region21: #{tpu_custom_call.1} parent=1 // pred_fallthru
      _
    // Predicated region
    $region22: #{tpu_custom_call.1} parent=1 // pred_check
      _
    $region23: #{tpu_custom_call.1} parent=1 // pred_check_branch
      %25 = sbr.rel (0) target = $region25
    $region24: #{tpu_custom_call.1} parent=1 // pred_region
      _
    $region25: #{tpu_custom_call.1} parent=1 // pred_fallthru
      _
    // Predicated region
    $region26: #{tpu_custom_call.1} parent=1 // pred_check
      _
    $region27: #{tpu_custom_call.1} parent=1 // pred_check_branch
      %27 = sbr.rel (0) target = $region29
    $region28: #{tpu_custom_call.1} parent=1 // pred_region
      _
    $region29: #{tpu_custom_call.1} parent=1 // pred_fallthru
      _
    // Predicated region
    $region30: #{tpu_custom_call.1} parent=1 // pred_check
      _
    $region31: #{tpu_custom_call.1} parent=1 // pred_check_branch
      %29 = sbr.rel (0) target = $region33
    $region32: #{tpu_custom_call.1} parent=1 // pred_region
      _
    $region33: #{tpu_custom_call.1} parent=1 // pred_fallthru
      _
    %v30 = vld [vmem:[%s0] sm:$0xff]
    %v31 = vld [vmem:[%s0 + $0x8] sm:$0xff]
    %v32 = vld [vmem:[%s0 + $0x10] sm:$0xff]
    %v33 = vld [vmem:[%s0 + $0x18] sm:$0xff]
    %v34 = vld [vmem:[%s0 + $0x20] sm:$0xff]
    %v35 = vld [vmem:[%s0 + $0x28] sm:$0xff]
    %v36 = vld [vmem:[%s0 + $0x30] sm:$0xff]
    %v37 = vld [vmem:[%s0 + $0x38] sm:$0xff]
    %v38 = vld [vmem:[%s0 + $0x40] sm:$0xff]
    %v39 = vld [vmem:[%s0 + $0x48] sm:$0xff]
    %v40 = vld [vmem:[%s0 + $0x50] sm:$0xff]
    %v41 = vld [vmem:[%s0 + $0x58] sm:$0xff]
    %v42 = vld [vmem:[%s0 + $0x60] sm:$0xff]
    %v43 = vld [vmem:[%s0 + $0x68] sm:$0xff]
    %v44 = vld [vmem:[%s0 + $0x70] sm:$0xff]
    %v45 = vld [vmem:[%s0 + $0x78] sm:$0xff]
    %v46 = vld [vmem:[%s0 + $0x80] sm:$0xff]
    %v47 = vld [vmem:[%s0 + $0x88] sm:$0xff]
    %v48 = vld [vmem:[%s0 + $0x90] sm:$0xff]
    %v49 = vld [vmem:[%s0 + $0x98] sm:$0xff]
    %v50 = vld [vmem:[%s0 + $0xa0] sm:$0xff]
    %v51 = vld [vmem:[%s0 + $0xa8] sm:$0xff]
    %v52 = vld [vmem:[%s0 + $0xb0] sm:$0xff]
    %v53 = vld [vmem:[%s0 + $0xb8] sm:$0xff]
    %v54 = vld [vmem:[%s0 + $0xc0] sm:$0xff]
    %v55 = vld [vmem:[%s0 + $0xc8] sm:$0xff]
    %v56 = vld [vmem:[%s0 + $0xd0] sm:$0xff]
    %v57 = vld [vmem:[%s0 + $0xd8] sm:$0xff]
    %v58 = vld [vmem:[%s0 + $0xe0] sm:$0xff]
    %v59 = vld [vmem:[%s0 + $0xe8] sm:$0xff]
    %v60 = vld [vmem:[%s0 + $0xf0] sm:$0xff]
    %v61 = vld [vmem:[%s0 + $0xf8] sm:$0xff]
    %v62 = vld [vmem:[%s0 + $0x100] sm:$0xff]
    %v63 = vld [vmem:[%s0 + $0x108] sm:$0xff]
    %v64 = vld [vmem:[%s0 + $0x110] sm:$0xff]
    %v65 = vld [vmem:[%s0 + $0x118] sm:$0xff]
    %v66 = vld [vmem:[%s0 + $0x120] sm:$0xff]
    %v67 = vld [vmem:[%s0 + $0x128] sm:$0xff]
    %v68 = vld [vmem:[%s0 + $0x130] sm:$0xff]
    %v69 = vld [vmem:[%s0 + $0x138] sm:$0xff]
    %v70 = vld [vmem:[%s0 + $0x140] sm:$0xff]
    %v71 = vld [vmem:[%s0 + $0x148] sm:$0xff]
    %v72 = vld [vmem:[%s0 + $0x150] sm:$0xff]
    %v73 = vld [vmem:[%s0 + $0x158] sm:$0xff]
    %v74 = vld [vmem:[%s0 + $0x160] sm:$0xff]
    %v75 = vld [vmem:[%s0 + $0x168] sm:$0xff]
    %v76 = vld [vmem:[%s0 + $0x170] sm:$0xff]
    %v77 = vld [vmem:[%s0 + $0x178] sm:$0xff]
    %v78 = vld [vmem:[%s0 + $0x180] sm:$0xff]
    %v79 = vld [vmem:[%s0 + $0x188] sm:$0xff]
    %v80 = vld [vmem:[%s0 + $0x190] sm:$0xff]
    %v81 = vld [vmem:[%s0 + $0x198] sm:$0xff]
    %v82 = vld [vmem:[%s0 + $0x1a0] sm:$0xff]
    %v83 = vld [vmem:[%s0 + $0x1a8] sm:$0xff]
    %v84 = vld [vmem:[%s0 + $0x1b0] sm:$0xff]
    %v85 = vld [vmem:[%s0 + $0x1b8] sm:$0xff]
    %v86 = vld [vmem:[%s0 + $0x1c0] sm:$0xff]
    %v87 = vld [vmem:[%s0 + $0x1c8] sm:$0xff]
    %v88 = vld [vmem:[%s0 + $0x1d0] sm:$0xff]
    %v89 = vld [vmem:[%s0 + $0x1d8] sm:$0xff]
    %v90 = vld [vmem:[%s0 + $0x1e0] sm:$0xff]
    %v91 = vld [vmem:[%s0 + $0x1e8] sm:$0xff]
    %v92 = vld [vmem:[%s0 + $0x1f0] sm:$0xff]
    %v93 = vld [vmem:[%s0 + $0x1f8] sm:$0xff]
    %v94 = vld [vmem:[%s1] sm:$0xff]
    %v95 = vld [vmem:[%s1 + $0x8] sm:$0xff]
    %vm96 = vcmask 64512
    %v98 = vsel %vm96, %v30, 0
    %v101 = vsel %vm96, %v31, 0
    %v104 = vsel %vm96, %v32, 0
    %v107 = vsel %vm96, %v33, 0
    %v110 = vsel %vm96, %v34, 0
    %v113 = vsel %vm96, %v35, 0
    %v116 = vsel %vm96, %v36, 0
    %v119 = vsel %vm96, %v37, 0
    %v122 = vsel %vm96, %v38, 0
    %v125 = vsel %vm96, %v39, 0
    %v128 = vsel %vm96, %v40, 0
    %v131 = vsel %vm96, %v41, 0
    %v134 = vsel %vm96, %v42, 0
    %v137 = vsel %vm96, %v43, 0
    %v140 = vsel %vm96, %v44, 0
    %v143 = vsel %vm96, %v45, 0
    %v146 = vsel %vm96, %v46, 0
    %v149 = vsel %vm96, %v47, 0
    %v152 = vsel %vm96, %v48, 0
    %v155 = vsel %vm96, %v49, 0
    %v158 = vsel %vm96, %v50, 0
    %v161 = vsel %vm96, %v51, 0
    %v164 = vsel %vm96, %v52, 0
    %v167 = vsel %vm96, %v53, 0
    %v170 = vsel %vm96, %v54, 0
    %v173 = vsel %vm96, %v55, 0
    %v176 = vsel %vm96, %v56, 0
    %v179 = vsel %vm96, %v57, 0
    %v182 = vsel %vm96, %v58, 0
    %v185 = vsel %vm96, %v59, 0
    %v188 = vsel %vm96, %v60, 0
    %v191 = vsel %vm96, %v61, 0
    %v194 = vsel %vm96, %v62, 0
    %v197 = vsel %vm96, %v63, 0
    %v200 = vsel %vm96, %v64, 0
    %v203 = vsel %vm96, %v65, 0
    %v206 = vsel %vm96, %v66, 0
    %v209 = vsel %vm96, %v67, 0
    %v212 = vsel %vm96, %v68, 0
    %v215 = vsel %vm96, %v69, 0
    %v218 = vsel %vm96, %v70, 0
    %v221 = vsel %vm96, %v71, 0
    %v224 = vsel %vm96, %v72, 0
    %v227 = vsel %vm96, %v73, 0
    %v230 = vsel %vm96, %v74, 0
    %v233 = vsel %vm96, %v75, 0
    %v236 = vsel %vm96, %v76, 0
    %v239 = vsel %vm96, %v77, 0
    %v242 = vsel %vm96, %v78, 0
    %v245 = vsel %vm96, %v79, 0
    %v248 = vsel %vm96, %v80, 0
    %v251 = vsel %vm96, %v81, 0
    %v254 = vsel %vm96, %v82, 0
    %v257 = vsel %vm96, %v83, 0
    %v260 = vsel %vm96, %v84, 0
    %v263 = vsel %vm96, %v85, 0
    %v266 = vsel %vm96, %v86, 0
    %v269 = vsel %vm96, %v87, 0
    %v272 = vsel %vm96, %v88, 0
    %v275 = vsel %vm96, %v89, 0
    %v278 = vsel %vm96, %v90, 0
    %v281 = vsel %vm96, %v91, 0
    %v284 = vsel %vm96, %v92, 0
    %v287 = vsel %vm96, %v93, 0
    %289 = vmatprep.subr.mxu0 %v95
    %290 = vmatpush1.msra.mxu0 %v94
    %291 = vmatprep.subr.mxu0 0.0
    %292 = vmatpush1.msra.mxu0 0.0
    %293 = vmatprep.subr.mxu0 0.0
    %294 = vmatpush1.msra.mxu0 0.0
    %295 = vmatprep.subr.mxu0 0.0
    %296 = vmatpush1.msra.mxu0 0.0
    %297 = vmatprep.subr.mxu0 0.0
    %298 = vmatpush1.msra.mxu0 0.0
    %299 = vmatprep.subr.mxu0 0.0
    %300 = vmatpush1.msra.mxu0 0.0
    %301 = vmatprep.subr.mxu0 0.0
    %302 = vmatpush1.msra.mxu0 0.0
    %303 = vmatprep.subr.mxu0 0.0
    %304 = vmatpush1.msra.mxu0 0.0
    %305 = vmatprep.subr.mxu0 0.0
    %306 = vmatpush1.msra.mxu0 0.0
    %307 = vmatprep.subr.mxu0 0.0
    %308 = vmatpush1.msra.mxu0 0.0
    %309 = vmatprep.subr.mxu0 0.0
    %310 = vmatpush1.msra.mxu0 0.0
    %311 = vmatprep.subr.mxu0 0.0
    %312 = vmatpush1.msra.mxu0 0.0
    %313 = vmatprep.subr.mxu0 0.0
    %314 = vmatpush1.msra.mxu0 0.0
    %315 = vmatprep.subr.mxu0 0.0
    %316 = vmatpush1.msra.mxu0 0.0
    %317 = vmatprep.subr.mxu0 0.0
    %318 = vmatpush1.msra.mxu0 0.0
    %319 = vmatprep.subr.mxu0 0.0
    %320 = vmatpush1.msra.mxu0 0.0
    %321 = vmatprep.subr.mxu0 0.0
    %322 = vmatpush1.msra.mxu0 0.0
    %323 = vmatprep.subr.mxu0 0.0
    %324 = vmatpush1.msra.mxu0 0.0
    %325 = vmatprep.subr.mxu0 0.0
    %326 = vmatpush1.msra.mxu0 0.0
    %327 = vmatprep.subr.mxu0 0.0
    %328 = vmatpush1.msra.mxu0 0.0
    %329 = vmatprep.subr.mxu0 0.0
    %330 = vmatpush1.msra.mxu0 0.0
    %331 = vmatprep.subr.mxu0 0.0
    %332 = vmatpush1.msra.mxu0 0.0
    %333 = vmatprep.subr.mxu0 0.0
    %334 = vmatpush1.msra.mxu0 0.0
    %335 = vmatprep.subr.mxu0 0.0
    %336 = vmatpush1.msra.mxu0 0.0
    %337 = vmatprep.subr.mxu0 0.0
    %338 = vmatpush1.msra.mxu0 0.0
    %339 = vmatprep.subr.mxu0 0.0
    %340 = vmatpush1.msra.mxu0 0.0
    %341 = vmatprep.subr.mxu0 0.0
    %342 = vmatpush1.msra.mxu0 0.0
    %343 = vmatprep.subr.mxu0 0.0
    %344 = vmatpush1.msra.mxu0 0.0
    %345 = vmatprep.subr.mxu0 0.0
    %346 = vmatpush1.msra.mxu0 0.0
    %347 = vmatprep.subr.mxu0 0.0
    %348 = vmatpush1.msra.mxu0 0.0
    %349 = vmatprep.subr.mxu0 0.0
    %350 = vmatpush1.msra.mxu0 0.0
    %351 = vmatprep.subr.mxu0 0.0
    %352 = vmatpush1.msra.mxu0 0.0
    %353 = vmatprep.mubr.f32.mxu0 0.0
    %354 = vmatmul.mubr.f32.gmra.mrb[0].mxu0 %v98
    %v355 = vpop.f32.mrb[0].mxu0
    %v356 = vadd.f32 0.0, %v355
    %v357 = vpop.f32.mrb[0].mxu0
    %v358 = vadd.f32 0.0, %v357
    %359 = vmatprep.mubr.f32.mxu0 0.0
    %360 = vmatmul.mubr.f32.gmra.mrb[0].mxu0 %v101
    %v361 = vpop.f32.mrb[0].mxu0
    %v362 = vadd.f32 0.0, %v361
    %v363 = vpop.f32.mrb[0].mxu0
    %v364 = vadd.f32 0.0, %v363
    %365 = vmatprep.mubr.f32.mxu0 0.0
    %366 = vmatmul.mubr.f32.gmra.mrb[0].mxu0 %v104
    %v367 = vpop.f32.mrb[0].mxu0
    %v368 = vadd.f32 0.0, %v367
    %v369 = vpop.f32.mrb[0].mxu0
    %v370 = vadd.f32 0.0, %v369
    %371 = vmatprep.mubr.f32.mxu0 0.0
    %372 = vmatmul.mubr.f32.gmra.mrb[0].mxu0 %v107
    %v373 = vpop.f32.mrb[0].mxu0
    %v374 = vadd.f32 0.0, %v373
    %v375 = vpop.f32.mrb[0].mxu0
    %v376 = vadd.f32 0.0, %v375
    %377 = vmatprep.mubr.f32.mxu0 0.0
    %378 = vmatmul.mubr.f32.gmra.mrb[0].mxu0 %v110
    %v379 = vpop.f32.mrb[0].mxu0
    %v380 = vadd.f32 0.0, %v379
    %v381 = vpop.f32.mrb[0].mxu0
    %v382 = vadd.f32 0.0, %v381
    %383 = vmatprep.mubr.f32.mxu0 0.0
    %384 = vmatmul.mubr.f32.gmra.mrb[0].mxu0 %v113
    %v385 = vpop.f32.mrb[0].mxu0
    %v386 = vadd.f32 0.0, %v385
    %v387 = vpop.f32.mrb[0].mxu0
    %v388 = vadd.f32 0.0, %v387
    %389 = vmatprep.mubr.f32.mxu0 0.0
    %390 = vmatmul.mubr.f32.gmra.mrb[0].mxu0 %v116
    %v391 = vpop.f32.mrb[0].mxu0
    %v392 = vadd.f32 0.0, %v391
    %v393 = vpop.f32.mrb[0].mxu0
    %v394 = vadd.f32 0.0, %v393
    %395 = vmatprep.mubr.f32.mxu0 0.0
    %396 = vmatmul.mubr.f32.gmra.mrb[0].mxu0 %v119
    %v397 = vpop.f32.mrb[0].mxu0
    %v398 = vadd.f32 0.0, %v397
    %v399 = vpop.f32.mrb[0].mxu0
    %v400 = vadd.f32 0.0, %v399
    %401 = vmatprep.mubr.f32.mxu0 0.0
    %402 = vmatmul.mubr.f32.gmra.mrb[0].mxu0 %v122
    %v403 = vpop.f32.mrb[0].mxu0
    %v404 = vadd.f32 0.0, %v403
    %v405 = vpop.f32.mrb[0].mxu0
    %v406 = vadd.f32 0.0, %v405
    %407 = vmatprep.mubr.f32.mxu0 0.0
    %408 = vmatmul.mubr.f32.gmra.mrb[0].mxu0 %v125
    %v409 = vpop.f32.mrb[0].mxu0
    %v410 = vadd.f32 0.0, %v409
    %v411 = vpop.f32.mrb[0].mxu0
    %v412 = vadd.f32 0.0, %v411
    %413 = vmatprep.mubr.f32.mxu0 0.0
    %414 = vmatmul.mubr.f32.gmra.mrb[0].mxu0 %v128
    %v415 = vpop.f32.mrb[0].mxu0
    %v416 = vadd.f32 0.0, %v415
    %v417 = vpop.f32.mrb[0].mxu0
    %v418 = vadd.f32 0.0, %v417
    %419 = vmatprep.mubr.f32.mxu0 0.0
    %420 = vmatmul.mubr.f32.gmra.mrb[0].mxu0 %v131
    %v421 = vpop.f32.mrb[0].mxu0
    %v422 = vadd.f32 0.0, %v421
    %v423 = vpop.f32.mrb[0].mxu0
    %v424 = vadd.f32 0.0, %v423
    %425 = vmatprep.mubr.f32.mxu0 0.0
    %426 = vmatmul.mubr.f32.gmra.mrb[0].mxu0 %v134
    %v427 = vpop.f32.mrb[0].mxu0
    %v428 = vadd.f32 0.0, %v427
    %v429 = vpop.f32.mrb[0].mxu0
    %v430 = vadd.f32 0.0, %v429
    %431 = vmatprep.mubr.f32.mxu0 0.0
    %432 = vmatmul.mubr.f32.gmra.mrb[0].mxu0 %v137
    %v433 = vpop.f32.mrb[0].mxu0
    %v434 = vadd.f32 0.0, %v433
    %v435 = vpop.f32.mrb[0].mxu0
    %v436 = vadd.f32 0.0, %v435
    %437 = vmatprep.mubr.f32.mxu0 0.0
    %438 = vmatmul.mubr.f32.gmra.mrb[0].mxu0 %v140
    %v439 = vpop.f32.mrb[0].mxu0
    %v440 = vadd.f32 0.0, %v439
    %v441 = vpop.f32.mrb[0].mxu0
    %v442 = vadd.f32 0.0, %v441
    %443 = vmatprep.mubr.f32.mxu0 0.0
    %444 = vmatmul.mubr.f32.gmra.mrb[0].mxu0 %v143
    %v445 = vpop.f32.mrb[0].mxu0
    %v446 = vadd.f32 0.0, %v445
    %v447 = vpop.f32.mrb[0].mxu0
    %v448 = vadd.f32 0.0, %v447
    %449 = vmatprep.mubr.f32.mxu0 0.0
    %450 = vmatmul.mubr.f32.gmra.mrb[0].mxu0 %v146
    %v451 = vpop.f32.mrb[0].mxu0
    %v452 = vadd.f32 0.0, %v451
    %v453 = vpop.f32.mrb[0].mxu0
    %v454 = vadd.f32 0.0, %v453
    %455 = vmatprep.mubr.f32.mxu0 0.0
    %456 = vmatmul.mubr.f32.gmra.mrb[0].mxu0 %v149
    %v457 = vpop.f32.mrb[0].mxu0
    %v458 = vadd.f32 0.0, %v457
    %v459 = vpop.f32.mrb[0].mxu0
    %v460 = vadd.f32 0.0, %v459
    %461 = vmatprep.mubr.f32.mxu0 0.0
    %462 = vmatmul.mubr.f32.gmra.mrb[0].mxu0 %v152
    %v463 = vpop.f32.mrb[0].mxu0
    %v464 = vadd.f32 0.0, %v463
    %v465 = vpop.f32.mrb[0].mxu0
    %v466 = vadd.f32 0.0, %v465
    %467 = vmatprep.mubr.f32.mxu0 0.0
    %468 = vmatmul.mubr.f32.gmra.mrb[0].mxu0 %v155
    %v469 = vpop.f32.mrb[0].mxu0
    %v470 = vadd.f32 0.0, %v469
    %v471 = vpop.f32.mrb[0].mxu0
    %v472 = vadd.f32 0.0, %v471
    %473 = vmatprep.mubr.f32.mxu0 0.0
    %474 = vmatmul.mubr.f32.gmra.mrb[0].mxu0 %v158
    %v475 = vpop.f32.mrb[0].mxu0
    %v476 = vadd.f32 0.0, %v475
    %v477 = vpop.f32.mrb[0].mxu0
    %v478 = vadd.f32 0.0, %v477
    %479 = vmatprep.mubr.f32.mxu0 0.0
    %480 = vmatmul.mubr.f32.gmra.mrb[0].mxu0 %v161
    %v481 = vpop.f32.mrb[0].mxu0
    %v482 = vadd.f32 0.0, %v481
    %v483 = vpop.f32.mrb[0].mxu0
    %v484 = vadd.f32 0.0, %v483
    %485 = vmatprep.mubr.f32.mxu0 0.0
    %486 = vmatmul.mubr.f32.gmra.mrb[0].mxu0 %v164
    %v487 = vpop.f32.mrb[0].mxu0
    %v488 = vadd.f32 0.0, %v487
    %v489 = vpop.f32.mrb[0].mxu0
    %v490 = vadd.f32 0.0, %v489
    %491 = vmatprep.mubr.f32.mxu0 0.0
    %492 = vmatmul.mubr.f32.gmra.mrb[0].mxu0 %v167
    %v493 = vpop.f32.mrb[0].mxu0
    %v494 = vadd.f32 0.0, %v493
    %v495 = vpop.f32.mrb[0].mxu0
    %v496 = vadd.f32 0.0, %v495
    %497 = vmatprep.mubr.f32.mxu0 0.0
    %498 = vmatmul.mubr.f32.gmra.mrb[0].mxu0 %v170
    %v499 = vpop.f32.mrb[0].mxu0
    %v500 = vadd.f32 0.0, %v499
    %v501 = vpop.f32.mrb[0].mxu0
    %v502 = vadd.f32 0.0, %v501
    %503 = vmatprep.mubr.f32.mxu0 0.0
    %504 = vmatmul.mubr.f32.gmra.mrb[0].mxu0 %v173
    %v505 = vpop.f32.mrb[0].mxu0
    %v506 = vadd.f32 0.0, %v505
    %v507 = vpop.f32.mrb[0].mxu0
    %v508 = vadd.f32 0.0, %v507
    %509 = vmatprep.mubr.f32.mxu0 0.0
    %510 = vmatmul.mubr.f32.gmra.mrb[0].mxu0 %v176
    %v511 = vpop.f32.mrb[0].mxu0
    %v512 = vadd.f32 0.0, %v511
    %v513 = vpop.f32.mrb[0].mxu0
    %v514 = vadd.f32 0.0, %v513
    %515 = vmatprep.mubr.f32.mxu0 0.0
    %516 = vmatmul.mubr.f32.gmra.mrb[0].mxu0 %v179
    %v517 = vpop.f32.mrb[0].mxu0
    %v518 = vadd.f32 0.0, %v517
    %v519 = vpop.f32.mrb[0].mxu0
    %v520 = vadd.f32 0.0, %v519
    %521 = vmatprep.mubr.f32.mxu0 0.0
    %522 = vmatmul.mubr.f32.gmra.mrb[0].mxu0 %v182
    %v523 = vpop.f32.mrb[0].mxu0
    %v524 = vadd.f32 0.0, %v523
    %v525 = vpop.f32.mrb[0].mxu0
    %v526 = vadd.f32 0.0, %v525
    %527 = vmatprep.mubr.f32.mxu0 0.0
    %528 = vmatmul.mubr.f32.gmra.mrb[0].mxu0 %v185
    %v529 = vpop.f32.mrb[0].mxu0
    %v530 = vadd.f32 0.0, %v529
    %v531 = vpop.f32.mrb[0].mxu0
    %v532 = vadd.f32 0.0, %v531
    %533 = vmatprep.mubr.f32.mxu0 0.0
    %534 = vmatmul.mubr.f32.gmra.mrb[0].mxu0 %v188
    %v535 = vpop.f32.mrb[0].mxu0
    %v536 = vadd.f32 0.0, %v535
    %v537 = vpop.f32.mrb[0].mxu0
    %v538 = vadd.f32 0.0, %v537
    %539 = vmatprep.mubr.f32.mxu0 0.0
    %540 = vmatmul.mubr.f32.gmra.mrb[0].mxu0 %v191
    %v541 = vpop.f32.mrb[0].mxu0
    %v542 = vadd.f32 0.0, %v541
    %v543 = vpop.f32.mrb[0].mxu0
    %v544 = vadd.f32 0.0, %v543
    %545 = vmatprep.mubr.f32.mxu0 0.0
    %546 = vmatmul.mubr.f32.gmra.mrb[0].mxu0 %v194
    %v547 = vpop.f32.mrb[0].mxu0
    %v548 = vadd.f32 0.0, %v547
    %v549 = vpop.f32.mrb[0].mxu0
    %v550 = vadd.f32 0.0, %v549
    %551 = vmatprep.mubr.f32.mxu0 0.0
    %552 = vmatmul.mubr.f32.gmra.mrb[0].mxu0 %v197
    %v553 = vpop.f32.mrb[0].mxu0
    %v554 = vadd.f32 0.0, %v553
    %v555 = vpop.f32.mrb[0].mxu0
    %v556 = vadd.f32 0.0, %v555
    %557 = vmatprep.mubr.f32.mxu0 0.0
    %558 = vmatmul.mubr.f32.gmra.mrb[0].mxu0 %v200
    %v559 = vpop.f32.mrb[0].mxu0
    %v560 = vadd.f32 0.0, %v559
    %v561 = vpop.f32.mrb[0].mxu0
    %v562 = vadd.f32 0.0, %v561
    %563 = vmatprep.mubr.f32.mxu0 0.0
    %564 = vmatmul.mubr.f32.gmra.mrb[0].mxu0 %v203
    %v565 = vpop.f32.mrb[0].mxu0
    %v566 = vadd.f32 0.0, %v565
    %v567 = vpop.f32.mrb[0].mxu0
    %v568 = vadd.f32 0.0, %v567
    %569 = vmatprep.mubr.f32.mxu0 0.0
    %570 = vmatmul.mubr.f32.gmra.mrb[0].mxu0 %v206
    %v571 = vpop.f32.mrb[0].mxu0
    %v572 = vadd.f32 0.0, %v571
    %v573 = vpop.f32.mrb[0].mxu0
    %v574 = vadd.f32 0.0, %v573
    %575 = vmatprep.mubr.f32.mxu0 0.0
    %576 = vmatmul.mubr.f32.gmra.mrb[0].mxu0 %v209
    %v577 = vpop.f32.mrb[0].mxu0
    %v578 = vadd.f32 0.0, %v577
    %v579 = vpop.f32.mrb[0].mxu0
    %v580 = vadd.f32 0.0, %v579
    %581 = vmatprep.mubr.f32.mxu0 0.0
    %582 = vmatmul.mubr.f32.gmra.mrb[0].mxu0 %v212
    %v583 = vpop.f32.mrb[0].mxu0
    %v584 = vadd.f32 0.0, %v583
    %v585 = vpop.f32.mrb[0].mxu0
    %v586 = vadd.f32 0.0, %v585
    %587 = vmatprep.mubr.f32.mxu0 0.0
    %588 = vmatmul.mubr.f32.gmra.mrb[0].mxu0 %v215
    %v589 = vpop.f32.mrb[0].mxu0
    %v590 = vadd.f32 0.0, %v589
    %v591 = vpop.f32.mrb[0].mxu0
    %v592 = vadd.f32 0.0, %v591
    %593 = vmatprep.mubr.f32.mxu0 0.0
    %594 = vmatmul.mubr.f32.gmra.mrb[0].mxu0 %v218
    %v595 = vpop.f32.mrb[0].mxu0
    %v596 = vadd.f32 0.0, %v595
    %v597 = vpop.f32.mrb[0].mxu0
    %v598 = vadd.f32 0.0, %v597
    %599 = vmatprep.mubr.f32.mxu0 0.0
    %600 = vmatmul.mubr.f32.gmra.mrb[0].mxu0 %v221
    %v601 = vpop.f32.mrb[0].mxu0
    %v602 = vadd.f32 0.0, %v601
    %v603 = vpop.f32.mrb[0].mxu0
    %v604 = vadd.f32 0.0, %v603
    %605 = vmatprep.mubr.f32.mxu0 0.0
    %606 = vmatmul.mubr.f32.gmra.mrb[0].mxu0 %v224
    %v607 = vpop.f32.mrb[0].mxu0
    %v608 = vadd.f32 0.0, %v607
    %v609 = vpop.f32.mrb[0].mxu0
    %v610 = vadd.f32 0.0, %v609
    %611 = vmatprep.mubr.f32.mxu0 0.0
    %612 = vmatmul.mubr.f32.gmra.mrb[0].mxu0 %v227
    %v613 = vpop.f32.mrb[0].mxu0
    %v614 = vadd.f32 0.0, %v613
    %v615 = vpop.f32.mrb[0].mxu0
    %v616 = vadd.f32 0.0, %v615
    %617 = vmatprep.mubr.f32.mxu0 0.0
    %618 = vmatmul.mubr.f32.gmra.mrb[0].mxu0 %v230
    %v619 = vpop.f32.mrb[0].mxu0
    %v620 = vadd.f32 0.0, %v619
    %v621 = vpop.f32.mrb[0].mxu0
    %v622 = vadd.f32 0.0, %v621
    %623 = vmatprep.mubr.f32.mxu0 0.0
    %624 = vmatmul.mubr.f32.gmra.mrb[0].mxu0 %v233
    %v625 = vpop.f32.mrb[0].mxu0
    %v626 = vadd.f32 0.0, %v625
    %v627 = vpop.f32.mrb[0].mxu0
    %v628 = vadd.f32 0.0, %v627
    %629 = vmatprep.mubr.f32.mxu0 0.0
    %630 = vmatmul.mubr.f32.gmra.mrb[0].mxu0 %v236
    %v631 = vpop.f32.mrb[0].mxu0
    %v632 = vadd.f32 0.0, %v631
    %v633 = vpop.f32.mrb[0].mxu0
    %v634 = vadd.f32 0.0, %v633
    %635 = vmatprep.mubr.f32.mxu0 0.0
    %636 = vmatmul.mubr.f32.gmra.mrb[0].mxu0 %v239
    %v637 = vpop.f32.mrb[0].mxu0
    %v638 = vadd.f32 0.0, %v637
    %v639 = vpop.f32.mrb[0].mxu0
    %v640 = vadd.f32 0.0, %v639
    %641 = vmatprep.mubr.f32.mxu0 0.0
    %642 = vmatmul.mubr.f32.gmra.mrb[0].mxu0 %v242
    %v643 = vpop.f32.mrb[0].mxu0
    %v644 = vadd.f32 0.0, %v643
    %v645 = vpop.f32.mrb[0].mxu0
    %v646 = vadd.f32 0.0, %v645
    %647 = vmatprep.mubr.f32.mxu0 0.0
    %648 = vmatmul.mubr.f32.gmra.mrb[0].mxu0 %v245
    %v649 = vpop.f32.mrb[0].mxu0
    %v650 = vadd.f32 0.0, %v649
    %v651 = vpop.f32.mrb[0].mxu0
    %v652 = vadd.f32 0.0, %v651
    %653 = vmatprep.mubr.f32.mxu0 0.0
    %654 = vmatmul.mubr.f32.gmra.mrb[0].mxu0 %v248
    %v655 = vpop.f32.mrb[0].mxu0
    %v656 = vadd.f32 0.0, %v655
    %v657 = vpop.f32.mrb[0].mxu0
    %v658 = vadd.f32 0.0, %v657
    %659 = vmatprep.mubr.f32.mxu0 0.0
    %660 = vmatmul.mubr.f32.gmra.mrb[0].mxu0 %v251
    %v661 = vpop.f32.mrb[0].mxu0
    %v662 = vadd.f32 0.0, %v661
    %v663 = vpop.f32.mrb[0].mxu0
    %v664 = vadd.f32 0.0, %v663
    %665 = vmatprep.mubr.f32.mxu0 0.0
    %666 = vmatmul.mubr.f32.gmra.mrb[0].mxu0 %v254
    %v667 = vpop.f32.mrb[0].mxu0
    %v668 = vadd.f32 0.0, %v667
    %v669 = vpop.f32.mrb[0].mxu0
    %v670 = vadd.f32 0.0, %v669
    %671 = vmatprep.mubr.f32.mxu0 0.0
    %672 = vmatmul.mubr.f32.gmra.mrb[0].mxu0 %v257
    %v673 = vpop.f32.mrb[0].mxu0
    %v674 = vadd.f32 0.0, %v673
    %v675 = vpop.f32.mrb[0].mxu0
    %v676 = vadd.f32 0.0, %v675
    %677 = vmatprep.mubr.f32.mxu0 0.0
    %678 = vmatmul.mubr.f32.gmra.mrb[0].mxu0 %v260
    %v679 = vpop.f32.mrb[0].mxu0
    %v680 = vadd.f32 0.0, %v679
    %v681 = vpop.f32.mrb[0].mxu0
    %v682 = vadd.f32 0.0, %v681
    %683 = vmatprep.mubr.f32.mxu0 0.0
    %684 = vmatmul.mubr.f32.gmra.mrb[0].mxu0 %v263
    %v685 = vpop.f32.mrb[0].mxu0
    %v686 = vadd.f32 0.0, %v685
    %v687 = vpop.f32.mrb[0].mxu0
    %v688 = vadd.f32 0.0, %v687
    %689 = vmatprep.mubr.f32.mxu0 0.0
    %690 = vmatmul.mubr.f32.gmra.mrb[0].mxu0 %v266
    %v691 = vpop.f32.mrb[0].mxu0
    %v692 = vadd.f32 0.0, %v691
    %v693 = vpop.f32.mrb[0].mxu0
    %v694 = vadd.f32 0.0, %v693
    %695 = vmatprep.mubr.f32.mxu0 0.0
    %696 = vmatmul.mubr.f32.gmra.mrb[0].mxu0 %v269
    %v697 = vpop.f32.mrb[0].mxu0
    %v698 = vadd.f32 0.0, %v697
    %v699 = vpop.f32.mrb[0].mxu0
    %v700 = vadd.f32 0.0, %v699
    %701 = vmatprep.mubr.f32.mxu0 0.0
    %702 = vmatmul.mubr.f32.gmra.mrb[0].mxu0 %v272
    %v703 = vpop.f32.mrb[0].mxu0
    %v704 = vadd.f32 0.0, %v703
    %v705 = vpop.f32.mrb[0].mxu0
    %v706 = vadd.f32 0.0, %v705
    %707 = vmatprep.mubr.f32.mxu0 0.0
    %708 = vmatmul.mubr.f32.gmra.mrb[0].mxu0 %v275
    %v709 = vpop.f32.mrb[0].mxu0
    %v710 = vadd.f32 0.0, %v709
    %v711 = vpop.f32.mrb[0].mxu0
    %v712 = vadd.f32 0.0, %v711
    %713 = vmatprep.mubr.f32.mxu0 0.0
    %714 = vmatmul.mubr.f32.gmra.mrb[0].mxu0 %v278
    %v715 = vpop.f32.mrb[0].mxu0
    %v716 = vadd.f32 0.0, %v715
    %v717 = vpop.f32.mrb[0].mxu0
    %v718 = vadd.f32 0.0, %v717
    %719 = vmatprep.mubr.f32.mxu0 0.0
    %720 = vmatmul.mubr.f32.gmra.mrb[0].mxu0 %v281
    %v721 = vpop.f32.mrb[0].mxu0
    %v722 = vadd.f32 0.0, %v721
    %v723 = vpop.f32.mrb[0].mxu0
    %v724 = vadd.f32 0.0, %v723
    %725 = vmatprep.mubr.f32.mxu0 0.0
    %726 = vmatmul.mubr.f32.gmra.mrb[0].mxu0 %v284
    %v727 = vpop.f32.mrb[0].mxu0
    %v728 = vadd.f32 0.0, %v727
    %v729 = vpop.f32.mrb[0].mxu0
    %v730 = vadd.f32 0.0, %v729
    %731 = vmatprep.mubr.f32.mxu0 0.0
    %732 = vmatmul.mubr.f32.gmra.mrb[0].mxu0 %v287
    %v733 = vpop.f32.mrb[0].mxu0
    %v734 = vadd.f32 0.0, %v733
    %v735 = vpop.f32.mrb[0].mxu0
    %v736 = vadd.f32 0.0, %v735
    %737 = vdwg.mxu0
    %v738 = vlaneseq
    %v739 = vshrl.u32 %v738, 7
    %v740 = vadd.s32 %v739, 8
    %v741 = vadd.s32 %v739, 16
    %v742 = vadd.s32 %v739, 24
    %v743 = vadd.s32 %v739, 32
    %v744 = vadd.s32 %v739, 40
    %v745 = vadd.s32 %v739, 48
    %v746 = vadd.s32 %v739, 56
    %v747 = vld [vmem:[%s3] sm:$0x3]
    %v748 = vlaneseq
    %v749 = vshrl.u32 %v748, 7
    %v750 = vsub.s32 0, %v749
    %v751 = vrot.slane %v747, %v750
    %v752 = vlaneseq
    %v753 = vshrl.u32 %v752, 7
    %v754 = vsub.s32 1, %v753
    %v755 = vrot.slane %v747, %v754
    %vm756 = vcmp.lt.s32.totalorder %v739, %v751
    %vm757 = vcmp.lt.s32.totalorder %v739, %v755
    %vm758 = vcmp.lt.s32.totalorder %v740, %v751
    %vm759 = vcmp.lt.s32.totalorder %v740, %v755
    %vm760 = vcmp.lt.s32.totalorder %v741, %v751
    %vm761 = vcmp.lt.s32.totalorder %v741, %v755
    %vm762 = vcmp.lt.s32.totalorder %v742, %v751
    %vm763 = vcmp.lt.s32.totalorder %v742, %v755
    %vm764 = vcmp.lt.s32.totalorder %v743, %v751
    %vm765 = vcmp.lt.s32.totalorder %v743, %v755
    %vm766 = vcmp.lt.s32.totalorder %v744, %v751
    %vm767 = vcmp.lt.s32.totalorder %v744, %v755
    %vm768 = vcmp.lt.s32.totalorder %v745, %v751
    %vm769 = vcmp.lt.s32.totalorder %v745, %v755
    %vm770 = vcmp.lt.s32.totalorder %v746, %v751
    %vm771 = vcmp.lt.s32.totalorder %v746, %v755
    %v772 = vsel %vm756, %v356, -inf
    %v773 = vsel %vm757, %v358, -inf
    %v774 = vsel %vm758, %v362, -inf
    %v775 = vsel %vm759, %v364, -inf
    %v776 = vsel %vm760, %v368, -inf
    %v777 = vsel %vm761, %v370, -inf
    %v778 = vsel %vm762, %v374, -inf
    %v779 = vsel %vm763, %v376, -inf
    %v780 = vsel %vm764, %v380, -inf
    %v781 = vsel %vm765, %v382, -inf
    %v782 = vsel %vm766, %v386, -inf
    %v783 = vsel %vm767, %v388, -inf
    %v784 = vsel %vm768, %v392, -inf
    %v785 = vsel %vm769, %v394, -inf
    %v786 = vsel %vm770, %v398, -inf
    %v787 = vsel %vm771, %v400, -inf
    %v788 = vsel %vm756, %v404, -inf
    %v789 = vsel %vm757, %v406, -inf
    %v790 = vsel %vm758, %v410, -inf
    %v791 = vsel %vm759, %v412, -inf
    %v792 = vsel %vm760, %v416, -inf
    %v793 = vsel %vm761, %v418, -inf
    %v794 = vsel %vm762, %v422, -inf
    %v795 = vsel %vm763, %v424, -inf
    %v796 = vsel %vm764, %v428, -inf
    %v797 = vsel %vm765, %v430, -inf
    %v798 = vsel %vm766, %v434, -inf
    %v799 = vsel %vm767, %v436, -inf
    %v800 = vsel %vm768, %v440, -inf
    %v801 = vsel %vm769, %v442, -inf
    %v802 = vsel %vm770, %v446, -inf
    %v803 = vsel %vm771, %v448, -inf
    %v804 = vsel %vm756, %v452, -inf
    %v805 = vsel %vm757, %v454, -inf
    %v806 = vsel %vm758, %v458, -inf
    %v807 = vsel %vm759, %v460, -inf
    %v808 = vsel %vm760, %v464, -inf
    %v809 = vsel %vm761, %v466, -inf
    %v810 = vsel %vm762, %v470, -inf
    %v811 = vsel %vm763, %v472, -inf
    %v812 = vsel %vm764, %v476, -inf
    %v813 = vsel %vm765, %v478, -inf
    %v814 = vsel %vm766, %v482, -inf
    %v815 = vsel %vm767, %v484, -inf
    %v816 = vsel %vm768, %v488, -inf
    %v817 = vsel %vm769, %v490, -inf
    %v818 = vsel %vm770, %v494, -inf
    %v819 = vsel %vm771, %v496, -inf
    %v820 = vsel %vm756, %v500, -inf
    %v821 = vsel %vm757, %v502, -inf
    %v822 = vsel %vm758, %v506, -inf
    %v823 = vsel %vm759, %v508, -inf
    %v824 = vsel %vm760, %v512, -inf
    %v825 = vsel %vm761, %v514, -inf
    %v826 = vsel %vm762, %v518, -inf
    %v827 = vsel %vm763, %v520, -inf
    %v828 = vsel %vm764, %v524, -inf
    %v829 = vsel %vm765, %v526, -inf
    %v830 = vsel %vm766, %v530, -inf
    %v831 = vsel %vm767, %v532, -inf
    %v832 = vsel %vm768, %v536, -inf
    %v833 = vsel %vm769, %v538, -inf
    %v834 = vsel %vm770, %v542, -inf
    %v835 = vsel %vm771, %v544, -inf
    %v836 = vsel %vm756, %v548, -inf
    %v837 = vsel %vm757, %v550, -inf
    %v838 = vsel %vm758, %v554, -inf
    %v839 = vsel %vm759, %v556, -inf
    %v840 = vsel %vm760, %v560, -inf
    %v841 = vsel %vm761, %v562, -inf
    %v842 = vsel %vm762, %v566, -inf
    %v843 = vsel %vm763, %v568, -inf
    %v844 = vsel %vm764, %v572, -inf
    %v845 = vsel %vm765, %v574, -inf
    %v846 = vsel %vm766, %v578, -inf
    %v847 = vsel %vm767, %v580, -inf
    %v848 = vsel %vm768, %v584, -inf
    %v849 = vsel %vm769, %v586, -inf
    %v850 = vsel %vm770, %v590, -inf
    %v851 = vsel %vm771, %v592, -inf
    %v852 = vsel %vm756, %v596, -inf
    %v853 = vsel %vm757, %v598, -inf
    %v854 = vsel %vm758, %v602, -inf
    %v855 = vsel %vm759, %v604, -inf
    %v856 = vsel %vm760, %v608, -inf
    %v857 = vsel %vm761, %v610, -inf
    %v858 = vsel %vm762, %v614, -inf
    %v859 = vsel %vm763, %v616, -inf
    %v860 = vsel %vm764, %v620, -inf
    %v861 = vsel %vm765, %v622, -inf
    %v862 = vsel %vm766, %v626, -inf
    %v863 = vsel %vm767, %v628, -inf
    %v864 = vsel %vm768, %v632, -inf
    %v865 = vsel %vm769, %v634, -inf
    %v866 = vsel %vm770, %v638, -inf
    %v867 = vsel %vm771, %v640, -inf
    %v868 = vsel %vm756, %v644, -inf
    %v869 = vsel %vm757, %v646, -inf
    %v870 = vsel %vm758, %v650, -inf
    %v871 = vsel %vm759, %v652, -inf
    %v872 = vsel %vm760, %v656, -inf
    %v873 = vsel %vm761, %v658, -inf
    %v874 = vsel %vm762, %v662, -inf
    %v875 = vsel %vm763, %v664, -inf
    %v876 = vsel %vm764, %v668, -inf
    %v877 = vsel %vm765, %v670, -inf
    %v878 = vsel %vm766, %v674, -inf
    %v879 = vsel %vm767, %v676, -inf
    %v880 = vsel %vm768, %v680, -inf
    %v881 = vsel %vm769, %v682, -inf
    %v882 = vsel %vm770, %v686, -inf
    %v883 = vsel %vm771, %v688, -inf
    %v884 = vsel %vm756, %v692, -inf
    %v885 = vsel %vm757, %v694, -inf
    %v886 = vsel %vm758, %v698, -inf
    %v887 = vsel %vm759, %v700, -inf
    %v888 = vsel %vm760, %v704, -inf
    %v889 = vsel %vm761, %v706, -inf
    %v890 = vsel %vm762, %v710, -inf
    %v891 = vsel %vm763, %v712, -inf
    %v892 = vsel %vm764, %v716, -inf
    %v893 = vsel %vm765, %v718, -inf
    %v894 = vsel %vm766, %v722, -inf
    %v895 = vsel %vm767, %v724, -inf
    %v896 = vsel %vm768, %v728, -inf
    %v897 = vsel %vm769, %v730, -inf
    %v898 = vsel %vm770, %v734, -inf
    %v899 = vsel %vm771, %v736, -inf
    %v900 = vmax.f32 %v772, %v774
    %v901 = vmax.f32 %v900, %v776
    %v902 = vmax.f32 %v901, %v778
    %v903 = vmax.f32 %v902, %v780
    %v904 = vmax.f32 %v903, %v782
    %v905 = vmax.f32 %v904, %v784
    %v906 = vmax.f32 %v905, %v786
    %v907 = vrot.slane %v906, 4
    %v908 = vmax.f32 %v906, %v907
    %v909 = vrot.slane %v908, 2
    %v910 = vmax.f32 %v908, %v909
    %v911 = vrot.slane %v910, 1
    %v912 = vmax.f32 %v910, %v911
    %v913 = vmax.f32 %v773, %v775
    %v914 = vmax.f32 %v913, %v777
    %v915 = vmax.f32 %v914, %v779
    %v916 = vmax.f32 %v915, %v781
    %v917 = vmax.f32 %v916, %v783
    %v918 = vmax.f32 %v917, %v785
    %v919 = vmax.f32 %v918, %v787
    %v920 = vrot.slane %v919, 4
    %v921 = vmax.f32 %v919, %v920
    %v922 = vrot.slane %v921, 2
    %v923 = vmax.f32 %v921, %v922
    %v924 = vrot.slane %v923, 1
    %v925 = vmax.f32 %v923, %v924
    %v926 = vmax.f32 %v788, %v790
    %v927 = vmax.f32 %v926, %v792
    %v928 = vmax.f32 %v927, %v794
    %v929 = vmax.f32 %v928, %v796
    %v930 = vmax.f32 %v929, %v798
    %v931 = vmax.f32 %v930, %v800
    %v932 = vmax.f32 %v931, %v802
    %v933 = vrot.slane %v932, 4
    %v934 = vmax.f32 %v932, %v933
    %v935 = vrot.slane %v934, 2
    %v936 = vmax.f32 %v934, %v935
    %v937 = vrot.slane %v936, 1
    %v938 = vmax.f32 %v936, %v937
    %v939 = vmax.f32 %v789, %v791
    %v940 = vmax.f32 %v939, %v793
    %v941 = vmax.f32 %v940, %v795
    %v942 = vmax.f32 %v941, %v797
    %v943 = vmax.f32 %v942, %v799
    %v944 = vmax.f32 %v943, %v801
    %v945 = vmax.f32 %v944, %v803
    %v946 = vrot.slane %v945, 4
    %v947 = vmax.f32 %v945, %v946
    %v948 = vrot.slane %v947, 2
    %v949 = vmax.f32 %v947, %v948
    %v950 = vrot.slane %v949, 1
    %v951 = vmax.f32 %v949, %v950
    %v952 = vmax.f32 %v804, %v806
    %v953 = vmax.f32 %v952, %v808
    %v954 = vmax.f32 %v953, %v810
    %v955 = vmax.f32 %v954, %v812
    %v956 = vmax.f32 %v955, %v814
    %v957 = vmax.f32 %v956, %v816
    %v958 = vmax.f32 %v957, %v818
    %v959 = vrot.slane %v958, 4
    %v960 = vmax.f32 %v958, %v959
    %v961 = vrot.slane %v960, 2
    %v962 = vmax.f32 %v960, %v961
    %v963 = vrot.slane %v962, 1
    %v964 = vmax.f32 %v962, %v963
    %v965 = vmax.f32 %v805, %v807
    %v966 = vmax.f32 %v965, %v809
    %v967 = vmax.f32 %v966, %v811
    %v968 = vmax.f32 %v967, %v813
    %v969 = vmax.f32 %v968, %v815
    %v970 = vmax.f32 %v969, %v817
    %v971 = vmax.f32 %v970, %v819
    %v972 = vrot.slane %v971, 4
    %v973 = vmax.f32 %v971, %v972
    %v974 = vrot.slane %v973, 2
    %v975 = vmax.f32 %v973, %v974
    %v976 = vrot.slane %v975, 1
    %v977 = vmax.f32 %v975, %v976
    %v978 = vmax.f32 %v820, %v822
    %v979 = vmax.f32 %v978, %v824
    %v980 = vmax.f32 %v979, %v826
    %v981 = vmax.f32 %v980, %v828
    %v982 = vmax.f32 %v981, %v830
    %v983 = vmax.f32 %v982, %v832
    %v984 = vmax.f32 %v983, %v834
    %v985 = vrot.slane %v984, 4
    %v986 = vmax.f32 %v984, %v985
    %v987 = vrot.slane %v986, 2
    %v988 = vmax.f32 %v986, %v987
    %v989 = vrot.slane %v988, 1
    %v990 = vmax.f32 %v988, %v989
    %v991 = vmax.f32 %v821, %v823
    %v992 = vmax.f32 %v991, %v825
    %v993 = vmax.f32 %v992, %v827
    %v994 = vmax.f32 %v993, %v829
    %v995 = vmax.f32 %v994, %v831
    %v996 = vmax.f32 %v995, %v833
    %v997 = vmax.f32 %v996, %v835
    %v998 = vrot.slane %v997, 4
    %v999 = vmax.f32 %v997, %v998
    %v1000 = vrot.slane %v999, 2
    %v1001 = vmax.f32 %v999, %v1000
    %v1002 = vrot.slane %v1001, 1
    %v1003 = vmax.f32 %v1001, %v1002
    %v1004 = vmax.f32 %v836, %v838
    %v1005 = vmax.f32 %v1004, %v840
    %v1006 = vmax.f32 %v1005, %v842
    %v1007 = vmax.f32 %v1006, %v844
    %v1008 = vmax.f32 %v1007, %v846
    %v1009 = vmax.f32 %v1008, %v848
    %v1010 = vmax.f32 %v1009, %v850
    %v1011 = vrot.slane %v1010, 4
    %v1012 = vmax.f32 %v1010, %v1011
    %v1013 = vrot.slane %v1012, 2
    %v1014 = vmax.f32 %v1012, %v1013
    %v1015 = vrot.slane %v1014, 1
    %v1016 = vmax.f32 %v1014, %v1015
    %v1017 = vmax.f32 %v837, %v839
    %v1018 = vmax.f32 %v1017, %v841
    %v1019 = vmax.f32 %v1018, %v843
    %v1020 = vmax.f32 %v1019, %v845
    %v1021 = vmax.f32 %v1020, %v847
    %v1022 = vmax.f32 %v1021, %v849
    %v1023 = vmax.f32 %v1022, %v851
    %v1024 = vrot.slane %v1023, 4
    %v1025 = vmax.f32 %v1023, %v1024
    %v1026 = vrot.slane %v1025, 2
    %v1027 = vmax.f32 %v1025, %v1026
    %v1028 = vrot.slane %v1027, 1
    %v1029 = vmax.f32 %v1027, %v1028
    %v1030 = vmax.f32 %v852, %v854
    %v1031 = vmax.f32 %v1030, %v856
    %v1032 = vmax.f32 %v1031, %v858
    %v1033 = vmax.f32 %v1032, %v860
    %v1034 = vmax.f32 %v1033, %v862
    %v1035 = vmax.f32 %v1034, %v864
    %v1036 = vmax.f32 %v1035, %v866
    %v1037 = vrot.slane %v1036, 4
    %v1038 = vmax.f32 %v1036, %v1037
    %v1039 = vrot.slane %v1038, 2
    %v1040 = vmax.f32 %v1038, %v1039
    %v1041 = vrot.slane %v1040, 1
    %v1042 = vmax.f32 %v1040, %v1041
    %v1043 = vmax.f32 %v853, %v855
    %v1044 = vmax.f32 %v1043, %v857
    %v1045 = vmax.f32 %v1044, %v859
    %v1046 = vmax.f32 %v1045, %v861
    %v1047 = vmax.f32 %v1046, %v863
    %v1048 = vmax.f32 %v1047, %v865
    %v1049 = vmax.f32 %v1048, %v867
    %v1050 = vrot.slane %v1049, 4
    %v1051 = vmax.f32 %v1049, %v1050
    %v1052 = vrot.slane %v1051, 2
    %v1053 = vmax.f32 %v1051, %v1052
    %v1054 = vrot.slane %v1053, 1
    %v1055 = vmax.f32 %v1053, %v1054
    %v1056 = vmax.f32 %v868, %v870
    %v1057 = vmax.f32 %v1056, %v872
    %v1058 = vmax.f32 %v1057, %v874
    %v1059 = vmax.f32 %v1058, %v876
    %v1060 = vmax.f32 %v1059, %v878
    %v1061 = vmax.f32 %v1060, %v880
    %v1062 = vmax.f32 %v1061, %v882
    %v1063 = vrot.slane %v1062, 4
    %v1064 = vmax.f32 %v1062, %v1063
    %v1065 = vrot.slane %v1064, 2
    %v1066 = vmax.f32 %v1064, %v1065
    %v1067 = vrot.slane %v1066, 1
    %v1068 = vmax.f32 %v1066, %v1067
    %v1069 = vmax.f32 %v869, %v871
    %v1070 = vmax.f32 %v1069, %v873
    %v1071 = vmax.f32 %v1070, %v875
    %v1072 = vmax.f32 %v1071, %v877
    %v1073 = vmax.f32 %v1072, %v879
    %v1074 = vmax.f32 %v1073, %v881
    %v1075 = vmax.f32 %v1074, %v883
    %v1076 = vrot.slane %v1075, 4
    %v1077 = vmax.f32 %v1075, %v1076
    %v1078 = vrot.slane %v1077, 2
    %v1079 = vmax.f32 %v1077, %v1078
    %v1080 = vrot.slane %v1079, 1
    %v1081 = vmax.f32 %v1079, %v1080
    %v1082 = vmax.f32 %v884, %v886
    %v1083 = vmax.f32 %v1082, %v888
    %v1084 = vmax.f32 %v1083, %v890
    %v1085 = vmax.f32 %v1084, %v892
    %v1086 = vmax.f32 %v1085, %v894
    %v1087 = vmax.f32 %v1086, %v896
    %v1088 = vmax.f32 %v1087, %v898
    %v1089 = vrot.slane %v1088, 4
    %v1090 = vmax.f32 %v1088, %v1089
    %v1091 = vrot.slane %v1090, 2
    %v1092 = vmax.f32 %v1090, %v1091
    %v1093 = vrot.slane %v1092, 1
    %v1094 = vmax.f32 %v1092, %v1093
    %v1095 = vmax.f32 %v885, %v887
    %v1096 = vmax.f32 %v1095, %v889
    %v1097 = vmax.f32 %v1096, %v891
    %v1098 = vmax.f32 %v1097, %v893
    %v1099 = vmax.f32 %v1098, %v895
    %v1100 = vmax.f32 %v1099, %v897
    %v1101 = vmax.f32 %v1100, %v899
    %v1102 = vrot.slane %v1101, 4
    %v1103 = vmax.f32 %v1101, %v1102
    %v1104 = vrot.slane %v1103, 2
    %v1105 = vmax.f32 %v1103, %v1104
    %v1106 = vrot.slane %v1105, 1
    %v1107 = vmax.f32 %v1105, %v1106
    %v1108 = vld [vmem:[%s2] sm:$0x3]
    %v1110 = vlaneseq
    %v1111 = vshrl.u32 %v1110, 7
    %v1112 = vsub.s32 0, %v1111
    %v1113 = vrot.slane %v1108, %v1112
    %v1114 = vlaneseq
    %v1115 = vshrl.u32 %v1114, 7
    %v1116 = vsub.s32 1, %v1115
    %v1117 = vrot.slane %v1108, %v1116
    %v1120 = vadd.f32 %v912, %v1113
    %v1121 = vadd.f32 %v925, %v1117
    %v1122 = vadd.f32 %v938, %v1113
    %v1123 = vadd.f32 %v951, %v1117
    %v1124 = vadd.f32 %v964, %v1113
    %v1125 = vadd.f32 %v977, %v1117
    %v1126 = vadd.f32 %v990, %v1113
    %v1127 = vadd.f32 %v1003, %v1117
    %v1128 = vadd.f32 %v1016, %v1113
    %v1129 = vadd.f32 %v1029, %v1117
    %v1130 = vadd.f32 %v1042, %v1113
    %v1131 = vadd.f32 %v1055, %v1117
    %v1132 = vadd.f32 %v1068, %v1113
    %v1133 = vadd.f32 %v1081, %v1117
    %v1134 = vadd.f32 %v1094, %v1113
    %v1135 = vadd.f32 %v1107, %v1117
    %v1136 = vld [vmem:[%s4] sm:$0xff]
    %v1137 = vld [vmem:[%s4 + $0x8] sm:$0xff]
    %v1138 = vld [vmem:[%s4 + $0x10] sm:$0xff]
    %v1139 = vld [vmem:[%s4 + $0x18] sm:$0xff]
    %v1140 = vld [vmem:[%s4 + $0x20] sm:$0xff]
    %v1141 = vld [vmem:[%s4 + $0x28] sm:$0xff]
    %v1142 = vld [vmem:[%s4 + $0x30] sm:$0xff]
    %v1143 = vld [vmem:[%s4 + $0x38] sm:$0xff]
    %v1144 = vld [vmem:[%s4 + $0x40] sm:$0xff]
    %v1145 = vld [vmem:[%s4 + $0x48] sm:$0xff]
    %v1146 = vld [vmem:[%s4 + $0x50] sm:$0xff]
    %v1147 = vld [vmem:[%s4 + $0x58] sm:$0xff]
    %v1148 = vld [vmem:[%s4 + $0x60] sm:$0xff]
    %v1149 = vld [vmem:[%s4 + $0x68] sm:$0xff]
    %v1150 = vld [vmem:[%s4 + $0x70] sm:$0xff]
    %v1151 = vld [vmem:[%s4 + $0x78] sm:$0xff]
    %v1152 = vld [vmem:[%s4 + $0x80] sm:$0xff]
    %v1153 = vld [vmem:[%s4 + $0x88] sm:$0xff]
    %v1154 = vld [vmem:[%s4 + $0x90] sm:$0xff]
    %v1155 = vld [vmem:[%s4 + $0x98] sm:$0xff]
    %v1156 = vld [vmem:[%s4 + $0xa0] sm:$0xff]
    %v1157 = vld [vmem:[%s4 + $0xa8] sm:$0xff]
    %v1158 = vld [vmem:[%s4 + $0xb0] sm:$0xff]
    %v1159 = vld [vmem:[%s4 + $0xb8] sm:$0xff]
    %v1160 = vld [vmem:[%s4 + $0xc0] sm:$0xff]
    %v1161 = vld [vmem:[%s4 + $0xc8] sm:$0xff]
    %v1162 = vld [vmem:[%s4 + $0xd0] sm:$0xff]
    %v1163 = vld [vmem:[%s4 + $0xd8] sm:$0xff]
    %v1164 = vld [vmem:[%s4 + $0xe0] sm:$0xff]
    %v1165 = vld [vmem:[%s4 + $0xe8] sm:$0xff]
    %v1166 = vld [vmem:[%s4 + $0xf0] sm:$0xff]
    %v1167 = vld [vmem:[%s4 + $0xf8] sm:$0xff]
    %v1168 = vld [vmem:[%s5] sm:$0x1]
    %v1170 = vlaneseq
    %v1171 = vshrl.u32 %v1170, 7
    %v1172 = vsub.s32 0, %v1171
    %v1173 = vrot.slane %v1168, %v1172
    %v1191 = vrot.slane %v1122, 7
    %vm1192 = vcmask 1041409
    %v1193 = vsel %vm1192, %v1191, %v1120
    %v1194 = vrot.slane %v1124, 6
    %vm1195 = vcmask 1042434
    %v1196 = vsel %vm1195, %v1194, %v1193
    %v1197 = vrot.slane %v1126, 5
    %vm1198 = vcmask 1043459
    %v1199 = vsel %vm1198, %v1197, %v1196
    %v1200 = vrot.slane %v1128, 4
    %vm1201 = vcmask 1044484
    %v1202 = vsel %vm1201, %v1200, %v1199
    %v1203 = vrot.slane %v1130, 3
    %vm1204 = vcmask 1045509
    %v1205 = vsel %vm1204, %v1203, %v1202
    %v1206 = vrot.slane %v1132, 2
    %vm1207 = vcmask 1046534
    %v1208 = vsel %vm1207, %v1206, %v1205
    %v1209 = vrot.slane %v1134, 1
    %vm1210 = vcmask 1047559
    %v1211 = vsel %vm1210, %v1209, %v1208
    %v1212 = vrot.slane %v1123, 7
    %v1213 = vsel %vm1192, %v1212, %v1121
    %v1214 = vrot.slane %v1125, 6
    %v1215 = vsel %vm1195, %v1214, %v1213
    %v1216 = vrot.slane %v1127, 5
    %v1217 = vsel %vm1198, %v1216, %v1215
    %v1218 = vrot.slane %v1129, 4
    %v1219 = vsel %vm1201, %v1218, %v1217
    %v1220 = vrot.slane %v1131, 3
    %v1221 = vsel %vm1204, %v1220, %v1219
    %v1222 = vrot.slane %v1133, 2
    %v1223 = vsel %vm1207, %v1222, %v1221
    %v1224 = vrot.slane %v1135, 1
    %v1225 = vsel %vm1210, %v1224, %v1223
    %1228 = vmatprep.subr.mxu0 0.0
    %1229 = vmatpush1.msra.mxu0 %v1136
    %1230 = vmatprep.subr.mxu0 0.0
    %1231 = vmatpush1.msra.mxu0 %v1137
    %1232 = vmatprep.subr.mxu0 0.0
    %1233 = vmatpush1.msra.mxu0 %v1138
    %1234 = vmatprep.subr.mxu0 0.0
    %1235 = vmatpush1.msra.mxu0 %v1139
    %1236 = vmatprep.subr.mxu0 0.0
    %1237 = vmatpush1.msra.mxu0 %v1140
    %1238 = vmatprep.subr.mxu0 0.0
    %1239 = vmatpush1.msra.mxu0 %v1141
    %1240 = vmatprep.subr.mxu0 0.0
    %1241 = vmatpush1.msra.mxu0 %v1142
    %1242 = vmatprep.subr.mxu0 0.0
    %1243 = vmatpush1.msra.mxu0 %v1143
    %1244 = vmatprep.subr.mxu0 0.0
    %1245 = vmatpush1.msra.mxu0 %v1144
    %1246 = vmatprep.subr.mxu0 0.0
    %1247 = vmatpush1.msra.mxu0 %v1145
    %1248 = vmatprep.subr.mxu0 0.0
    %1249 = vmatpush1.msra.mxu0 %v1146
    %1250 = vmatprep.subr.mxu0 0.0
    %1251 = vmatpush1.msra.mxu0 %v1147
    %1252 = vmatprep.subr.mxu0 0.0
    %1253 = vmatpush1.msra.mxu0 %v1148
    %1254 = vmatprep.subr.mxu0 0.0
    %1255 = vmatpush1.msra.mxu0 %v1149
    %1256 = vmatprep.subr.mxu0 0.0
    %1257 = vmatpush1.msra.mxu0 %v1150
    %1258 = vmatprep.subr.mxu0 0.0
    %1259 = vmatpush1.msra.mxu0 %v1151
    %1260 = vmatprep.subr.mxu0 0.0
    %1261 = vmatpush1.msra.mxu0 %v1152
    %1262 = vmatprep.subr.mxu0 0.0
    %1263 = vmatpush1.msra.mxu0 %v1153
    %1264 = vmatprep.subr.mxu0 0.0
    %1265 = vmatpush1.msra.mxu0 %v1154
    %1266 = vmatprep.subr.mxu0 0.0
    %1267 = vmatpush1.msra.mxu0 %v1155
    %1268 = vmatprep.subr.mxu0 0.0
    %1269 = vmatpush1.msra.mxu0 %v1156
    %1270 = vmatprep.subr.mxu0 0.0
    %1271 = vmatpush1.msra.mxu0 %v1157
    %1272 = vmatprep.subr.mxu0 0.0
    %1273 = vmatpush1.msra.mxu0 %v1158
    %1274 = vmatprep.subr.mxu0 0.0
    %1275 = vmatpush1.msra.mxu0 %v1159
    %1276 = vmatprep.subr.mxu0 0.0
    %1277 = vmatpush1.msra.mxu0 %v1160
    %1278 = vmatprep.subr.mxu0 0.0
    %1279 = vmatpush1.msra.mxu0 %v1161
    %1280 = vmatprep.subr.mxu0 0.0
    %1281 = vmatpush1.msra.mxu0 %v1162
    %1282 = vmatprep.subr.mxu0 0.0
    %1283 = vmatpush1.msra.mxu0 %v1163
    %1284 = vmatprep.subr.mxu0 0.0
    %1285 = vmatpush1.msra.mxu0 %v1164
    %1286 = vmatprep.subr.mxu0 0.0
    %1287 = vmatpush1.msra.mxu0 %v1165
    %1288 = vmatprep.subr.mxu0 0.0
    %1289 = vmatpush1.msra.mxu0 %v1166
    %1290 = vmatprep.subr.mxu0 0.0
    %1291 = vmatpush1.msra.mxu0 %v1167
    %1292 = vmatprep.mubr.f32.mxu0 %v1225
    %1293 = vmatmul.mubr.f32.gmra.mrb[0].mxu0 %v1211
    %v1294 = vpop.f32.mrb[0].mxu0
    %v1295 = vadd.f32 %v1173, %v1294
    %v1296 = vpop.f32.mrb[0].mxu0
    %1297 = vdwg.mxu0
    %v1298 = vld [vmem:[%s6] sm:$0xff]
    %v1299 = vld [vmem:[%s6 + $0x8] sm:$0xff]
    %v1300 = vld [vmem:[%s6 + $0x10] sm:$0xff]
    %v1301 = vld [vmem:[%s6 + $0x18] sm:$0xff]
    %v1302 = vld [vmem:[%s6 + $0x20] sm:$0xff]
    %v1303 = vld [vmem:[%s6 + $0x28] sm:$0xff]
    %v1304 = vld [vmem:[%s6 + $0x30] sm:$0xff]
    %v1305 = vld [vmem:[%s6 + $0x38] sm:$0xff]
    %v1306 = vld [vmem:[%s6 + $0x40] sm:$0xff]
    %v1307 = vld [vmem:[%s6 + $0x48] sm:$0xff]
    %v1308 = vld [vmem:[%s6 + $0x50] sm:$0xff]
    %v1309 = vld [vmem:[%s6 + $0x58] sm:$0xff]
    %v1310 = vld [vmem:[%s6 + $0x60] sm:$0xff]
    %v1311 = vld [vmem:[%s6 + $0x68] sm:$0xff]
    %v1312 = vld [vmem:[%s6 + $0x70] sm:$0xff]
    %v1313 = vld [vmem:[%s6 + $0x78] sm:$0xff]
    %v1314 = vld [vmem:[%s7] sm:$0x1]
    %v1316 = vlaneseq
    %v1317 = vshrl.u32 %v1316, 7
    %v1318 = vsub.s32 0, %v1317
    %v1319 = vrot.slane %v1314, %v1318
    %1321 = vmatprep.subr.mxu0 0.0
    %1322 = vmatpush1.msra.mxu0 %v1298
    %1323 = vmatprep.subr.mxu0 0.0
    %1324 = vmatpush1.msra.mxu0 %v1299
    %1325 = vmatprep.subr.mxu0 0.0
    %1326 = vmatpush1.msra.mxu0 %v1300
    %1327 = vmatprep.subr.mxu0 0.0
    %1328 = vmatpush1.msra.mxu0 %v1301
    %1329 = vmatprep.subr.mxu0 0.0
    %1330 = vmatpush1.msra.mxu0 %v1302
    %1331 = vmatprep.subr.mxu0 0.0
    %1332 = vmatpush1.msra.mxu0 %v1303
    %1333 = vmatprep.subr.mxu0 0.0
    %1334 = vmatpush1.msra.mxu0 %v1304
    %1335 = vmatprep.subr.mxu0 0.0
    %1336 = vmatpush1.msra.mxu0 %v1305
    %1337 = vmatprep.subr.mxu0 0.0
    %1338 = vmatpush1.msra.mxu0 %v1306
    %1339 = vmatprep.subr.mxu0 0.0
    %1340 = vmatpush1.msra.mxu0 %v1307
    %1341 = vmatprep.subr.mxu0 0.0
    %1342 = vmatpush1.msra.mxu0 %v1308
    %1343 = vmatprep.subr.mxu0 0.0
    %1344 = vmatpush1.msra.mxu0 %v1309
    %1345 = vmatprep.subr.mxu0 0.0
    %1346 = vmatpush1.msra.mxu0 %v1310
    %1347 = vmatprep.subr.mxu0 0.0
    %1348 = vmatpush1.msra.mxu0 %v1311
    %1349 = vmatprep.subr.mxu0 0.0
    %1350 = vmatpush1.msra.mxu0 %v1312
    %1351 = vmatprep.subr.mxu0 0.0
    %1352 = vmatpush1.msra.mxu0 %v1313
    %1353 = vmatprep.subr.mxu0 0.0
    %1354 = vmatpush1.msra.mxu0 0.0
    %1355 = vmatprep.subr.mxu0 0.0
    %1356 = vmatpush1.msra.mxu0 0.0
    %1357 = vmatprep.subr.mxu0 0.0
    %1358 = vmatpush1.msra.mxu0 0.0
    %1359 = vmatprep.subr.mxu0 0.0
    %1360 = vmatpush1.msra.mxu0 0.0
    %1361 = vmatprep.subr.mxu0 0.0
    %1362 = vmatpush1.msra.mxu0 0.0
    %1363 = vmatprep.subr.mxu0 0.0
    %1364 = vmatpush1.msra.mxu0 0.0
    %1365 = vmatprep.subr.mxu0 0.0
    %1366 = vmatpush1.msra.mxu0 0.0
    %1367 = vmatprep.subr.mxu0 0.0
    %1368 = vmatpush1.msra.mxu0 0.0
    %1369 = vmatprep.subr.mxu0 0.0
    %1370 = vmatpush1.msra.mxu0 0.0
    %1371 = vmatprep.subr.mxu0 0.0
    %1372 = vmatpush1.msra.mxu0 0.0
    %1373 = vmatprep.subr.mxu0 0.0
    %1374 = vmatpush1.msra.mxu0 0.0
    %1375 = vmatprep.subr.mxu0 0.0
    %1376 = vmatpush1.msra.mxu0 0.0
    %1377 = vmatprep.subr.mxu0 0.0
    %1378 = vmatpush1.msra.mxu0 0.0
    %1379 = vmatprep.subr.mxu0 0.0
    %1380 = vmatpush1.msra.mxu0 0.0
    %1381 = vmatprep.subr.mxu0 0.0
    %1382 = vmatpush1.msra.mxu0 0.0
    %1383 = vmatprep.subr.mxu0 0.0
    %1384 = vmatpush1.msra.mxu0 0.0
    %1385 = vmatprep.mubr.f32.mxu0 0.0
    %1386 = vmatmul.mubr.f32.gmra.mrb[0].mxu0 %v1295
    %v1387 = vpop.f32.mrb[0].mxu0
    %v1388 = vadd.f32 %v1319, %v1387
    %v1389 = vpop.f32.mrb[0].mxu0
    %1390 = vdwg.mxu0
    %1391 = vmax.xlane.f32.xlu0 %v1388
    %v1392 = vpop.xlane.xlu0 %1391
    %v1393 = vsub.f32 %v1388, %v1392
    %v1394 = vmul.f32 %v1393, 1.442695
    %v1395 = vpow.pop %v1394
    %1396 = vadd.xlane.f32.xlu0 %v1395
    %v1397 = vpop.xlane.xlu0 %1396
    %v1398 = vrcp.pop %v1397
    %v1399 = vmul.f32 %v1395, %v1398
    %1400 = vst [vmem:[#allocation2] sm:$0xff] %v1399
    // Predicated region
    $region34: #{tpu_custom_call.1} parent=1 // pred_check
      _
    $region35: #{tpu_custom_call.1} parent=1 // pred_check_branch
      %1402 = sbr.rel (0) target = $region37
    $region36: #{tpu_custom_call.1} parent=1 // pred_region
      %s1404 = ssub.s32 128, 128
      %1405 = vsyncadd [#allocation3], %s1404
      %s1407 = sshll.u32 [#allocation2], 4
      %s1408 = int_to_ptr.vmem [resolvable:$true] %s1407
      %1410 = dma.vmem_to_hbm [thread:$0]  %s1408, 128, %s8, [#allocation3]
    $region37: #{tpu_custom_call.1} parent=1 // pred_fallthru
      _
    // Predicated region
    $region38: #{tpu_custom_call.1} parent=1 // pred_check
      _
    $region39: #{tpu_custom_call.1} parent=1 // pred_check_branch
      %1412 = sbr.rel (0) target = $region41
    $region40: #{tpu_custom_call.1} parent=1 // pred_region
      %1413 = dma.done [#allocation3], 128
    $region41: #{tpu_custom_call.1} parent=1 // pred_fallthru
      _
    %1414 = vsyncpa [#allocation3], 1

</llo_original>
